<compile_context>
chip_gen: v7x
topology: tpu7x:2x2x1
jax: 0.10.0
libtpu: 0.0.40
codegen_flags: <defaults>
</compile_context>

<pallas_src>
import math

import jax
import jax.numpy as jnp
from jax import lax
from jax.experimental import pallas as pl
from jax.experimental.pallas import tpu as pltpu

LIMIT_A = -0.1
LIMIT_B = 1.1


def _round_up(x: int, m: int) -> int:
    return ((x + m - 1) // m) * m


def _balanced_tile(dim: int, cap: int, align: int) -> int:
    """Smallest `align`-multiple tile that covers `dim` in ceil(dim/cap) blocks."""
    n_blocks = max(1, -(-dim // cap))
    return _round_up(-(-dim // n_blocks), align)


def _l0_matmul_kernel(x_ref, wz_ref, b_ref, o_ref, acc_ref):
    """Pure NT matmul: wz = weight * gate precomputed wrapper-side (gm >= 2 path)."""
    k = pl.program_id(2)

    @pl.when(k == 0)
    def _():
        # Fold bias into the accumulator init instead of an epilogue add.
        acc_ref[...] = jnp.broadcast_to(b_ref[...].astype(jnp.float32), acc_ref.shape)

    # y_tile += x_tile @ wz_tile^T without materializing a transpose (NT matmul, f32 acc).
    acc_ref[...] += lax.dot_general(
        x_ref[...], wz_ref[...],
        dimension_numbers=(((1,), (1,)), ((), ())),
        preferred_element_type=jnp.float32,
    )

    @pl.when(k == pl.num_programs(2) - 1)
    def _():
        o_ref[...] = acc_ref[...].astype(o_ref.dtype)


def _l0_fused_gate_kernel(x_ref, w_ref, z_ref, b_ref, o_ref, acc_ref):
    """Small-batch path (gm == 1): stream weight + precomputed z, one VPU mul in-kernel."""
    k = pl.program_id(2)

    @pl.when(k == 0)
    def _():
        acc_ref[...] = jnp.broadcast_to(b_ref[...].astype(jnp.float32), acc_ref.shape)

    # z is already clipped and already in the weight dtype (bf16 params -> native bf16 VPU
    # mul on v6e/v7x; f32 params -> f32 mul). Sigmoid/stretch were done wrapper-side.
    wz = w_ref[...] * z_ref[...]                                         # (tn, tk)

    acc_ref[...] += lax.dot_general(
        x_ref[...], wz,
        dimension_numbers=(((1,), (1,)), ((), ())),
        preferred_element_type=jnp.float32,
    )

    @pl.when(k == pl.num_programs(2) - 1)
    def _():
        o_ref[...] = acc_ref[...].astype(o_ref.dtype)


def l0_dense_forward(x, weight, qz_loga, bias):
    """Eval-mode L0Dense forward. x:(B,in), weight/qz_loga:(out,in), bias:(out,)."""
    B, in_features = x.shape
    out_features = weight.shape[0]

    # ---- tile sizes: multiples of (8, 128); cap 512 keeps the double-buffered working
    # set (~9 MiB at 512^3 f32) inside the default scoped VMEM on v5e/v6e/v7x.
    tm = _balanced_tile(B, 512, 8)
    tn = _balanced_tile(out_features, 512, 128)
    tk = _balanced_tile(in_features, 512, 128)

    Mp = _round_up(B, tm)
    gm = Mp // tm

    # v7x has 2 TensorCores sharded over "parallel" grid axes: when there is a single M
    # block, make sure there are >= 2 output-column blocks (when out_features allows it).
    Np0 = _round_up(out_features, 128)
    if gm == 1 and Np0 >= 256:
        tn = min(tn, _round_up(Np0 // 2, 128))

    Np = _round_up(out_features, tn)
    Kp = _round_up(in_features, tk)
    gn, gk = Np // tn, Kp // tk

    # ---- hard-concrete deterministic gate, one fused XLA elementwise op (f32).
    z = jnp.clip(
        jax.nn.sigmoid(qz_loga.astype(jnp.float32)) * (LIMIT_B - LIMIT_A) + LIMIT_A,
        0.0, 1.0,
    )

    # ---- zero-pad to tile boundaries (padded weight/gate entries are zero; padded bias is
    # zero; padded outputs are sliced off).
    x_p = jnp.pad(x, ((0, Mp - B), (0, Kp - in_features)))
    b_p = jnp.pad(bias, (0, Np - out_features)).reshape(1, Np)

    out_bytes = Mp * Np * x.dtype.itemsize
    compiler_params = pltpu.CompilerParams(
        dimension_semantics=("parallel", "parallel", "arbitrary"),
    )

    if gm >= 2:
        # Precompute wz = weight * z once; kernel is a pure NT matmul.
        wz = (weight.astype(jnp.float32) * z).astype(weight.dtype)
        wz_p = jnp.pad(wz, ((0, Np - out_features), (0, Kp - in_features)))

        cost = pl.CostEstimate(
            flops=2 * Mp * Np * Kp,
            transcendentals=0,
            bytes_accessed=int(
                x_p.size * x_p.dtype.itemsize * gn
                + wz_p.size * wz_p.dtype.itemsize * gm
                + b_p.size * b_p.dtype.itemsize
                + out_bytes
            ),
        )

        out_p = pl.pallas_call(
            _l0_matmul_kernel,
            out_shape=jax.ShapeDtypeStruct((Mp, Np), x.dtype),
            grid_spec=pltpu.PrefetchScalarGridSpec(
                num_scalar_prefetch=0,
                grid=(gm, gn, gk),
                in_specs=[
                    pl.BlockSpec((tm, tk), lambda i, j, k: (i, k)),   # x
                    pl.BlockSpec((tn, tk), lambda i, j, k: (j, k)),   # wz
                    pl.BlockSpec((1, tn), lambda i, j, k: (0, j)),    # bias (init only)
                ],
                out_specs=pl.BlockSpec((tm, tn), lambda i, j, k: (i, j)),
                scratch_shapes=[pltpu.VMEM((tm, tn), jnp.float32)],
            ),
            compiler_params=compiler_params,
            cost_estimate=cost,
        )(x_p, wz_p, b_p)
    else:
        # Small batch: stream weight + z (weight dtype); single VPU mul fused in-kernel.
        z_c = z.astype(weight.dtype)
        w_p = jnp.pad(weight, ((0, Np - out_features), (0, Kp - in_features)))
        z_p = jnp.pad(z_c, ((0, Np - out_features), (0, Kp - in_features)))

        cost = pl.CostEstimate(
            flops=2 * Mp * Np * Kp + Np * Kp,
            transcendentals=0,
            bytes_accessed=int(
                x_p.size * x_p.dtype.itemsize * gn
                + w_p.size * w_p.dtype.itemsize
                + z_p.size * z_p.dtype.itemsize
                + b_p.size * b_p.dtype.itemsize
                + out_bytes
            ),
        )

        out_p = pl.pallas_call(
            _l0_fused_gate_kernel,
            out_shape=jax.ShapeDtypeStruct((Mp, Np), x.dtype),
            grid_spec=pltpu.PrefetchScalarGridSpec(
                num_scalar_prefetch=0,
                grid=(gm, gn, gk),
                in_specs=[
                    pl.BlockSpec((tm, tk), lambda i, j, k: (i, k)),   # x
                    pl.BlockSpec((tn, tk), lambda i, j, k: (j, k)),   # weight
                    pl.BlockSpec((tn, tk), lambda i, j, k: (j, k)),   # z (precomputed gate)
                    pl.BlockSpec((1, tn), lambda i, j, k: (0, j)),    # bias (init only)
                ],
                out_specs=pl.BlockSpec((tm, tn), lambda i, j, k: (i, j)),
                scratch_shapes=[pltpu.VMEM((tm, tn), jnp.float32)],
            ),
            compiler_params=compiler_params,
            cost_estimate=cost,
        )(x_p, w_p, z_p, b_p)

    return out_p[:B, :out_features]


def reference_forward(x, weight, qz_loga, bias):
    pi = jax.nn.sigmoid(qz_loga)
    z = jnp.clip(pi * (LIMIT_B - LIMIT_A) + LIMIT_A, 0.0, 1.0)
    return x @ (weight * z).T + bias[None, :]


def _make_params(key, B, in_features, out_features, droprate=0.5):
    k_x, k_w, k_b, k_q = jax.random.split(key, 4)
    bound_w = math.sqrt(6.0 / in_features)          # kaiming_uniform_(a=sqrt(5)) bound
    weight = jax.random.uniform(
        k_w, (out_features, in_features), jnp.float32, -bound_w, bound_w)
    bound_b = 1.0 / math.sqrt(in_features)
    bias = jax.random.uniform(k_b, (out_features,), jnp.float32, -bound_b, bound_b)
    qz_mean = math.log(1.0 - droprate) - math.log(droprate)
    qz_loga = qz_mean + 0.01 * jax.random.normal(
        k_q, (out_features, in_features), jnp.float32)
    x = jax.random.normal(k_x, (B, in_features), jnp.float32)
    return x, weight, qz_loga, bias


if __name__ == "__main__":
    key = jax.random.PRNGKey(0)
    k1, k2, k3 = jax.random.split(key, 3)

    # 1) Small-shape primary test (fused-gate path, grid (1,1,1)): B=8, in=32, out=64.
    x, w, q, b = _make_params(k1, 8, 32, 64)
    out = jax.block_until_ready(l0_dense_forward(x, w, q, b))
    ref = reference_forward(x, w, q, b)
    assert out.shape == (8, 64)
    assert jnp.allclose(out, ref, atol=1e-4, rtol=1e-4), "mismatch vs reference (small)"

    # 2) Exercise the v7x dual-TC tn split (fused path, gm==1, gn==2): B=16, in=128, out=256.
    x, w, q, b = _make_params(k2, 16, 128, 256)
    out = jax.block_until_ready(l0_dense_forward(x, w, q, b))
    ref = reference_forward(x, w, q, b)
    assert jnp.allclose(out, ref, atol=1e-3, rtol=1e-3), "mismatch vs reference (tn split)"

    # 3) Exercise the precomputed-wz pure-matmul path (gm>=2): B=1152, in=256, out=384.
    x, w, q, b = _make_params(k3, 1152, 256, 384)
    out = jax.block_until_ready(l0_dense_forward(x, w, q, b))
    ref = reference_forward(x, w, q, b)
    assert jnp.allclose(out, ref, atol=2e-3, rtol=2e-3), "mismatch vs reference (large batch)"

    print("KERNEL_OK")
</pallas_src>

<mosaic_0001>
module attributes {stable_mosaic.version = 11 : i64} {
  func.func @_l0_fused_gate_kernel(%arg0: i32, %arg1: i32, %arg2: i32, %arg3: memref<8x128xf32, #tpu.memory_space<vmem>>, %arg4: memref<128x128xf32, #tpu.memory_space<vmem>>, %arg5: memref<128x128xf32, #tpu.memory_space<vmem>>, %arg6: memref<1x128xf32, #tpu.memory_space<vmem>>, %arg7: memref<8x128xf32, #tpu.memory_space<vmem>>, %arg8: memref<8x128xf32, #tpu.memory_space<vmem>>) attributes {dimension_semantics = [#tpu.dimension_semantics<parallel>, #tpu.dimension_semantics<parallel>, #tpu.dimension_semantics<arbitrary>], iteration_bounds = array<i64: 1, 1, 1>, scalar_prefetch = 0 : i64, scratch_operands = 1 : i64, tpu.core_type = #tpu.core_type<tc>, window_params = [{transform_indices = @transform_0, window_bounds = array<i64: 8, 128>}, {transform_indices = @transform_1, window_bounds = array<i64: 128, 128>}, {transform_indices = @transform_2, window_bounds = array<i64: 128, 128>}, {transform_indices = @transform_3, window_bounds = array<i64: 1, 128>}, {transform_indices = @transform_4, window_bounds = array<i64: 8, 128>}]} {
    %c0_i32 = arith.constant 0 : i32
    %0 = arith.cmpi eq, %arg2, %c0_i32 : i32
    %1 = arith.extui %0 : i1 to i32
    %c0_i32_0 = arith.constant 0 : i32
    %2 = arith.cmpi ne, %1, %c0_i32_0 : i32
    scf.if %2 {
      %c0_12 = arith.constant 0 : index
      %c0_13 = arith.constant 0 : index
      %14 = vector.load %arg6[%c0_12, %c0_13] : memref<1x128xf32, #tpu.memory_space<vmem>>, vector<1x128xf32>
      %15 = vector.shape_cast %14 : vector<1x128xf32> to vector<1x128xf32>
      %16 = vector.broadcast %15 : vector<1x128xf32> to vector<8x128xf32>
      %c0_14 = arith.constant 0 : index
      %c0_15 = arith.constant 0 : index
      %17 = vector.load %arg8[%c0_14, %c0_15] : memref<8x128xf32, #tpu.memory_space<vmem>>, vector<8x128xf32>
      tpu.vector_store %arg8[%c0_14, %c0_15], %16 {strides = array<i32>} : memref<8x128xf32, #tpu.memory_space<vmem>>, vector<8x128xf32>,
    } else {
    }
    %c0 = arith.constant 0 : index
    %c0_1 = arith.constant 0 : index
    %3 = vector.load %arg4[%c0, %c0_1] : memref<128x128xf32, #tpu.memory_space<vmem>>, vector<128x128xf32>
    %c0_2 = arith.constant 0 : index
    %c0_3 = arith.constant 0 : index
    %4 = vector.load %arg5[%c0_2, %c0_3] : memref<128x128xf32, #tpu.memory_space<vmem>>, vector<128x128xf32>
    %5 = arith.mulf %3, %4 : vector<128x128xf32>
    %c0_4 = arith.constant 0 : index
    %c0_5 = arith.constant 0 : index
    %6 = vector.load %arg8[%c0_4, %c0_5] : memref<8x128xf32, #tpu.memory_space<vmem>>, vector<8x128xf32>
    %c0_6 = arith.constant 0 : index
    %c0_7 = arith.constant 0 : index
    %7 = vector.load %arg3[%c0_6, %c0_7] : memref<8x128xf32, #tpu.memory_space<vmem>>, vector<8x128xf32>
    %cst = arith.constant dense<0.000000e+00> : vector<8x128xf32>
    %8 = tpu.matmul %7, %5, %cst {dimension_numbers = #tpu.dot_dimension_numbers<[1], [1], [0], [0], [0, 0, 1, 0], [], []>} : vector<8x128xf32>, vector<128x128xf32>, vector<8x128xf32> -> vector<8x128xf32>
    %9 = arith.addf %6, %8 : vector<8x128xf32>
    %c0_8 = arith.constant 0 : index
    %c0_9 = arith.constant 0 : index
    %10 = vector.load %arg8[%c0_8, %c0_9] : memref<8x128xf32, #tpu.memory_space<vmem>>, vector<8x128xf32>
    tpu.vector_store %arg8[%c0_8, %c0_9], %9 {strides = array<i32>} : memref<8x128xf32, #tpu.memory_space<vmem>>, vector<8x128xf32>,
    %c0_i32_10 = arith.constant 0 : i32
    %11 = arith.cmpi eq, %arg2, %c0_i32_10 : i32
    %12 = arith.extui %11 : i1 to i32
    %c0_i32_11 = arith.constant 0 : i32
    %13 = arith.cmpi ne, %12, %c0_i32_11 : i32
    scf.if %13 {
      %c0_12 = arith.constant 0 : index
      %c0_13 = arith.constant 0 : index
      %14 = vector.load %arg8[%c0_12, %c0_13] : memref<8x128xf32, #tpu.memory_space<vmem>>, vector<8x128xf32>
      %c0_14 = arith.constant 0 : index
      %c0_15 = arith.constant 0 : index
      %15 = vector.load %arg7[%c0_14, %c0_15] : memref<8x128xf32, #tpu.memory_space<vmem>>, vector<8x128xf32>
      tpu.vector_store %arg7[%c0_14, %c0_15], %14 {strides = array<i32>} : memref<8x128xf32, #tpu.memory_space<vmem>>, vector<8x128xf32>,
    } else {
    }
    return
  }
  func.func @transform_0(%arg0: i32, %arg1: i32, %arg2: i32) -> (i32, i32) {
    %c0_i32 = arith.constant 0 : i32
    return %arg0, %arg2 : i32, i32
  }
  func.func @transform_1(%arg0: i32, %arg1: i32, %arg2: i32) -> (i32, i32) {
    %c0_i32 = arith.constant 0 : i32
    return %arg1, %arg2 : i32, i32
  }
  func.func @transform_2(%arg0: i32, %arg1: i32, %arg2: i32) -> (i32, i32) {
    %c0_i32 = arith.constant 0 : i32
    return %arg1, %arg2 : i32, i32
  }
  func.func @transform_3(%arg0: i32, %arg1: i32, %arg2: i32) -> (i32, i32) {
    %c0_i32 = arith.constant 0 : i32
    %c0_i32_0 = arith.constant 0 : i32
    return %c0_i32, %arg1 : i32, i32
  }
  func.func @transform_4(%arg0: i32, %arg1: i32, %arg2: i32) -> (i32, i32) {
    %c0_i32 = arith.constant 0 : i32
    return %arg0, %arg1 : i32, i32
  }
}

</mosaic_0001>

<llo_original>
// kernel: tpu_custom_call.1
$region0: #{tpu_custom_call.1}
  #allocation0 [shape = 'u32[]', space=smem, size = 0x4, offset = 0x4, fixed_abs, tag = 'smem constant byte address 0x4 - core index']
  #allocation1 [shape = 'u32[144,128]{1,0:T(1,128)}', space=vmem, size = 0x12000, scoped, tag = 'internal scratch']
  #allocation2 [shape = 'f32[8,128]{1,0:T(8,128)}', space=vmem, size = 0x1000, scoped, tag = 'scratch operand']
  %s0 = inlined_call_operand.hbm [shape: f32[8,128], index: 0, kind: input, shape index: {}]
  %s1 = inlined_call_operand.hbm [shape: f32[128,128], index: 1, kind: input, shape index: {}]
  %s2 = inlined_call_operand.hbm [shape: f32[128,128], index: 2, kind: input, shape index: {}]
  %s3 = inlined_call_operand.vmem [shape: f32[1,128], index: 3, kind: input, shape index: {}]
  %s4 = inlined_call_operand.hbm [shape: f32[8,128], index: 4, kind: output, shape index: {}]
  %s5 = sld [smem:[#allocation0]]
  $region46: #{tpu_custom_call.1} parent=0
    _
  %s7 = ssub.s32 1, %s5
  %s8 = scalar_select 0, %s7, %s5
  $region1: #{tpu_custom_call.1} parent=0
    #allocation3 [shape = 'u8[4096]{0}', space=vmem, size = 0x1000, scoped, tag = 'input window, operand 0, single buffered']
    #allocation4 [shape = 's32[1]{0}', space=sflag, size = 0x4, scoped, tag = 'scoped memory for tpu_custom_call.1']
    #allocation5 [shape = 's32[1]{0}', space=sflag, size = 0x4, scoped, tag = 'scoped memory for tpu_custom_call.1']
    #allocation6 [shape = 'u8[65536]{0}', space=vmem, size = 0x10000, scoped, tag = 'input window, operand 1, single buffered']
    #allocation7 [shape = 's32[1]{0}', space=sflag, size = 0x4, scoped, tag = 'scoped memory for tpu_custom_call.1']
    #allocation8 [shape = 'u8[65536]{0}', space=vmem, size = 0x10000, scoped, tag = 'input window, operand 2, single buffered']
    #allocation9 [shape = 'u8[4096]{0}', space=vmem, size = 0x1000, scoped, tag = 'output window, operand 0, single buffered']
    %9 = vsyncpa [#allocation4], 0
    %10 = vsyncpa [#allocation7], 0
    %11 = vsyncpa [#allocation5], 0
    // Predicated region
    $region2: #{tpu_custom_call.1} parent=1 // pred_check
      _
    $region3: #{tpu_custom_call.1} parent=1 // pred_check_branch
      %13 = sbr.rel (0) target = $region5
    $region4: #{tpu_custom_call.1} parent=1 // pred_region
      %s15 = ssub.s32 128, 128
      %16 = vsyncadd [#allocation4], %s15
      %s18 = sshll.u32 [#allocation3], 4
      %s19 = int_to_ptr.vmem [resolvable:$true] %s18
      %21 = dma.hbm_to_vmem [thread:$0]  %s0, 128, %s19, [#allocation4]
    $region5: #{tpu_custom_call.1} parent=1 // pred_fallthru
      _
    // Predicated region
    $region6: #{tpu_custom_call.1} parent=1 // pred_check
      _
    $region7: #{tpu_custom_call.1} parent=1 // pred_check_branch
      %23 = sbr.rel (0) target = $region9
    $region8: #{tpu_custom_call.1} parent=1 // pred_region
      %s25 = ssub.s32 2048, 2048
      %26 = vsyncadd [#allocation7], %s25
      %s27 = sshll.u32 [#allocation6], 4
      %s28 = int_to_ptr.vmem [resolvable:$true] %s27
      %33 = dma.hbm_to_vmem [thread:$0]  %s1, 2048, %s28, [#allocation7], 128, 128, 8
    $region9: #{tpu_custom_call.1} parent=1 // pred_fallthru
      _
    // Predicated region
    $region10: #{tpu_custom_call.1} parent=1 // pred_check
      _
    $region11: #{tpu_custom_call.1} parent=1 // pred_check_branch
      %35 = sbr.rel (0) target = $region13
    $region12: #{tpu_custom_call.1} parent=1 // pred_region
      %s37 = ssub.s32 2048, 2048
      %38 = vsyncadd [#allocation7], %s37
      %s39 = sshll.u32 [#allocation8], 4
      %s40 = int_to_ptr.vmem [resolvable:$true] %s39
      %45 = dma.hbm_to_vmem [thread:$0]  %s2, 2048, %s40, [#allocation7], 128, 128, 8
    $region13: #{tpu_custom_call.1} parent=1 // pred_fallthru
      _
    // Predicated region
    $region14: #{tpu_custom_call.1} parent=1 // pred_check
      _
    $region15: #{tpu_custom_call.1} parent=1 // pred_check_branch
      %47 = sbr.rel (0) target = $region17
    $region16: #{tpu_custom_call.1} parent=1 // pred_region
      _
    $region17: #{tpu_custom_call.1} parent=1 // pred_fallthru
      _
    // Predicated region
    $region18: #{tpu_custom_call.1} parent=1 // pred_check
      _
    $region19: #{tpu_custom_call.1} parent=1 // pred_check_branch
      %49 = sbr.rel (0) target = $region21
    $region20: #{tpu_custom_call.1} parent=1 // pred_region
      %50 = dma.done [#allocation4], 128
    $region21: #{tpu_custom_call.1} parent=1 // pred_fallthru
      _
    // Predicated region
    $region22: #{tpu_custom_call.1} parent=1 // pred_check
      _
    $region23: #{tpu_custom_call.1} parent=1 // pred_check_branch
      %52 = sbr.rel (0) target = $region25
    $region24: #{tpu_custom_call.1} parent=1 // pred_region
      %53 = dma.done [#allocation7], 2048
    $region25: #{tpu_custom_call.1} parent=1 // pred_fallthru
      _
    // Predicated region
    $region26: #{tpu_custom_call.1} parent=1 // pred_check
      _
    $region27: #{tpu_custom_call.1} parent=1 // pred_check_branch
      %55 = sbr.rel (0) target = $region29
    $region28: #{tpu_custom_call.1} parent=1 // pred_region
      %56 = dma.done [#allocation7], 2048
    $region29: #{tpu_custom_call.1} parent=1 // pred_fallthru
      _
    %p57 = scmp.eq.s32.totalorder 0, 0
    // Predicated region
    $region30: #{tpu_custom_call.1} parent=1 // pred_check
      %p58 = pneg %p57
    $region31: #{tpu_custom_call.1} parent=1 // pred_check_branch
      %60 = sbr.rel (%p58) target = $region33
    $region32: #{tpu_custom_call.1} parent=1 // pred_region
      %v61 = vld [vmem:[%s3] sm:$0x1]
      %v63 = vlaneseq
      %v64 = vshrl.u32 %v63, 7
      %v65 = vsub.s32 0, %v64
      %v66 = vrot.slane %v61, %v65
      %68 = vst [vmem:[#allocation2] sm:$0xff] %v66
    $region33: #{tpu_custom_call.1} parent=1 // pred_fallthru
      _
    %v69 = vld [vmem:[#allocation6] sm:$0xff]
    %v70 = vld [vmem:[#allocation6 + $0x8] sm:$0xff]
    %v71 = vld [vmem:[#allocation6 + $0x10] sm:$0xff]
    %v72 = vld [vmem:[#allocation6 + $0x18] sm:$0xff]
    %v73 = vld [vmem:[#allocation6 + $0x20] sm:$0xff]
    %v74 = vld [vmem:[#allocation6 + $0x28] sm:$0xff]
    %v75 = vld [vmem:[#allocation6 + $0x30] sm:$0xff]
    %v76 = vld [vmem:[#allocation6 + $0x38] sm:$0xff]
    %v77 = vld [vmem:[#allocation6 + $0x40] sm:$0xff]
    %v78 = vld [vmem:[#allocation6 + $0x48] sm:$0xff]
    %v79 = vld [vmem:[#allocation6 + $0x50] sm:$0xff]
    %v80 = vld [vmem:[#allocation6 + $0x58] sm:$0xff]
    %v81 = vld [vmem:[#allocation6 + $0x60] sm:$0xff]
    %v82 = vld [vmem:[#allocation6 + $0x68] sm:$0xff]
    %v83 = vld [vmem:[#allocation6 + $0x70] sm:$0xff]
    %v84 = vld [vmem:[#allocation6 + $0x78] sm:$0xff]
    %v85 = vld [vmem:[#allocation8] sm:$0xff]
    %v86 = vld [vmem:[#allocation8 + $0x8] sm:$0xff]
    %v87 = vld [vmem:[#allocation8 + $0x10] sm:$0xff]
    %v88 = vld [vmem:[#allocation8 + $0x18] sm:$0xff]
    %v89 = vld [vmem:[#allocation8 + $0x20] sm:$0xff]
    %v90 = vld [vmem:[#allocation8 + $0x28] sm:$0xff]
    %v91 = vld [vmem:[#allocation8 + $0x30] sm:$0xff]
    %v92 = vld [vmem:[#allocation8 + $0x38] sm:$0xff]
    %v93 = vld [vmem:[#allocation8 + $0x40] sm:$0xff]
    %v94 = vld [vmem:[#allocation8 + $0x48] sm:$0xff]
    %v95 = vld [vmem:[#allocation8 + $0x50] sm:$0xff]
    %v96 = vld [vmem:[#allocation8 + $0x58] sm:$0xff]
    %v97 = vld [vmem:[#allocation8 + $0x60] sm:$0xff]
    %v98 = vld [vmem:[#allocation8 + $0x68] sm:$0xff]
    %v99 = vld [vmem:[#allocation8 + $0x70] sm:$0xff]
    %v100 = vld [vmem:[#allocation8 + $0x78] sm:$0xff]
    %v101 = vmul.f32 %v69, %v85
    %v102 = vmul.f32 %v70, %v86
    %v103 = vmul.f32 %v71, %v87
    %v104 = vmul.f32 %v72, %v88
    %v105 = vmul.f32 %v73, %v89
    %v106 = vmul.f32 %v74, %v90
    %v107 = vmul.f32 %v75, %v91
    %v108 = vmul.f32 %v76, %v92
    %v109 = vmul.f32 %v77, %v93
    %v110 = vmul.f32 %v78, %v94
    %v111 = vmul.f32 %v79, %v95
    %v112 = vmul.f32 %v80, %v96
    %v113 = vmul.f32 %v81, %v97
    %v114 = vmul.f32 %v82, %v98
    %v115 = vmul.f32 %v83, %v99
    %v116 = vmul.f32 %v84, %v100
    %v117 = vld [vmem:[#allocation2] sm:$0xff]
    %v118 = vld [vmem:[#allocation3] sm:$0xff]
    %119 = vmatprep.subr.mxu0 0.0
    %120 = vmatpush1.xpose.msra.mxu0 %v101
    %121 = vmatprep.subr.mxu0 0.0
    %122 = vmatpush1.xpose.msra.mxu0 %v102
    %123 = vmatprep.subr.mxu0 0.0
    %124 = vmatpush1.xpose.msra.mxu0 %v103
    %125 = vmatprep.subr.mxu0 0.0
    %126 = vmatpush1.xpose.msra.mxu0 %v104
    %127 = vmatprep.subr.mxu0 0.0
    %128 = vmatpush1.xpose.msra.mxu0 %v105
    %129 = vmatprep.subr.mxu0 0.0
    %130 = vmatpush1.xpose.msra.mxu0 %v106
    %131 = vmatprep.subr.mxu0 0.0
    %132 = vmatpush1.xpose.msra.mxu0 %v107
    %133 = vmatprep.subr.mxu0 0.0
    %134 = vmatpush1.xpose.msra.mxu0 %v108
    %135 = vmatprep.subr.mxu0 0.0
    %136 = vmatpush1.xpose.msra.mxu0 %v109
    %137 = vmatprep.subr.mxu0 0.0
    %138 = vmatpush1.xpose.msra.mxu0 %v110
    %139 = vmatprep.subr.mxu0 0.0
    %140 = vmatpush1.xpose.msra.mxu0 %v111
    %141 = vmatprep.subr.mxu0 0.0
    %142 = vmatpush1.xpose.msra.mxu0 %v112
    %143 = vmatprep.subr.mxu0 0.0
    %144 = vmatpush1.xpose.msra.mxu0 %v113
    %145 = vmatprep.subr.mxu0 0.0
    %146 = vmatpush1.xpose.msra.mxu0 %v114
    %147 = vmatprep.subr.mxu0 0.0
    %148 = vmatpush1.xpose.msra.mxu0 %v115
    %149 = vmatprep.subr.mxu0 0.0
    %150 = vmatpush1.xpose.msra.mxu0 %v116
    %151 = vmatprep.subr.mxu0 0.0
    %152 = vmatpush1.xpose.msra.mxu0 0.0
    %153 = vmatprep.subr.mxu0 0.0
    %154 = vmatpush1.xpose.msra.mxu0 0.0
    %155 = vmatprep.subr.mxu0 0.0
    %156 = vmatpush1.xpose.msra.mxu0 0.0
    %157 = vmatprep.subr.mxu0 0.0
    %158 = vmatpush1.xpose.msra.mxu0 0.0
    %159 = vmatprep.subr.mxu0 0.0
    %160 = vmatpush1.xpose.msra.mxu0 0.0
    %161 = vmatprep.subr.mxu0 0.0
    %162 = vmatpush1.xpose.msra.mxu0 0.0
    %163 = vmatprep.subr.mxu0 0.0
    %164 = vmatpush1.xpose.msra.mxu0 0.0
    %165 = vmatprep.subr.mxu0 0.0
    %166 = vmatpush1.xpose.msra.mxu0 0.0
    %167 = vmatprep.subr.mxu0 0.0
    %168 = vmatpush1.xpose.msra.mxu0 0.0
    %169 = vmatprep.subr.mxu0 0.0
    %170 = vmatpush1.xpose.msra.mxu0 0.0
    %171 = vmatprep.subr.mxu0 0.0
    %172 = vmatpush1.xpose.msra.mxu0 0.0
    %173 = vmatprep.subr.mxu0 0.0
    %174 = vmatpush1.xpose.msra.mxu0 0.0
    %175 = vmatprep.subr.mxu0 0.0
    %176 = vmatpush1.xpose.msra.mxu0 0.0
    %177 = vmatprep.subr.mxu0 0.0
    %178 = vmatpush1.xpose.msra.mxu0 0.0
    %179 = vmatprep.subr.mxu0 0.0
    %180 = vmatpush1.xpose.msra.mxu0 0.0
    %181 = vmatprep.subr.mxu0 0.0
    %182 = vmatpush1.xpose.msra.mxu0 0.0
    %183 = vmatprep.mubr.f32.mxu0 0.0
    %184 = vmatmul.mubr.f32.gmra.mrb[0].mxu0 %v118
    %v185 = vpop.f32.mrb[0].mxu0
    %v186 = vadd.f32 0.0, %v185
    %v187 = vpop.f32.mrb[0].mxu0
    %188 = vdwg.mxu0
    %v189 = vadd.f32 %v117, %v186
    %190 = vst [vmem:[#allocation2] sm:$0xff] %v189
    // Predicated region
    $region34: #{tpu_custom_call.1} parent=1 // pred_check
      %p191 = pneg %p57
    $region35: #{tpu_custom_call.1} parent=1 // pred_check_branch
      %193 = sbr.rel (%p191) target = $region37
    $region36: #{tpu_custom_call.1} parent=1 // pred_region
      %v194 = vld [vmem:[#allocation2] sm:$0xff]
      %195 = vst [vmem:[#allocation9] sm:$0xff] %v194
    $region37: #{tpu_custom_call.1} parent=1 // pred_fallthru
      _
    // Predicated region
    $region38: #{tpu_custom_call.1} parent=1 // pred_check
      _
    $region39: #{tpu_custom_call.1} parent=1 // pred_check_branch
      %197 = sbr.rel (0) target = $region41
    $region40: #{tpu_custom_call.1} parent=1 // pred_region
      %s199 = ssub.s32 128, 128
      %200 = vsyncadd [#allocation5], %s199
      %s202 = sshll.u32 [#allocation9], 4
      %s203 = int_to_ptr.vmem [resolvable:$true] %s202
      %205 = dma.vmem_to_hbm [thread:$0]  %s203, 128, %s4, [#allocation5]
    $region41: #{tpu_custom_call.1} parent=1 // pred_fallthru
      _
    // Predicated region
    $region42: #{tpu_custom_call.1} parent=1 // pred_check
      _
    $region43: #{tpu_custom_call.1} parent=1 // pred_check_branch
      %207 = sbr.rel (0) target = $region45
    $region44: #{tpu_custom_call.1} parent=1 // pred_region
      %208 = dma.done [#allocation5], 128
    $region45: #{tpu_custom_call.1} parent=1 // pred_fallthru
      _
    %209 = vsyncpa [#allocation4], 1
    %210 = vsyncpa [#allocation7], 1
    %211 = vsyncpa [#allocation5], 1

</llo_original>
